<compile_context>
chip_gen: v5e
topology: v5e:2x2
jax: 0.10.0
libtpu: 0.0.40
codegen_flags: <defaults>
</compile_context>

<pallas_src>
import math

import jax
import jax.numpy as jnp
from jax.experimental import pallas as pl
from jax.experimental.pallas import tpu as pltpu


def _round_up(x: int, m: int) -> int:
    return ((x + m - 1) // m) * m


def _cdiv(a: int, b: int) -> int:
    return (a + b - 1) // b


def mlp_kernel(x_ref, w1_ref, b1_ref, w2_ref, b2_ref, w3_ref, b3_ref, o_ref):
    # In-kernel f32 -> bf16 cast of the batch tile (VPU, hides under MXU).
    x = x_ref[...].astype(jnp.bfloat16)

    # fc1 + ReLU : bf16 MXU inputs, f32 accumulation, fused epilogue so only
    # a bf16 h1 is carried into fc2.
    h1 = jnp.dot(x, w1_ref[...], preferred_element_type=jnp.float32)
    h1 = jnp.maximum(h1 + b1_ref[...], 0.0).astype(jnp.bfloat16)

    # fc2 + ReLU.
    h2 = jnp.dot(h1, w2_ref[...], preferred_element_type=jnp.float32)
    h2 = jnp.maximum(h2 + b2_ref[...], 0.0)

    # fc3 (out_dim = 1) + ReLU on the VPU/XLU: (TB,128) * (1,128) -> lane
    # reduction -> (TB,1).  Padded lanes of w3 are zero, so they drop out.
    h3 = jnp.sum(h2 * w3_ref[...], axis=-1, keepdims=True) + b3_ref[...]
    o_ref[...] = jnp.maximum(h3, 0.0).astype(o_ref.dtype)


def _choose_tiles(B: int, tb_cap: int):
    """Pick (TB, Bp, n_tiles) so pad waste is small and large batches span
    >= 2 grid steps (both TensorCores on v7x)."""
    tb_cap = max(8, _round_up(tb_cap, 8))
    if B <= tb_cap:
        n_tiles = 2 if B >= 2048 else 1
    else:
        n_tiles = _cdiv(B, tb_cap)
    TB = _round_up(_cdiv(B, n_tiles), 8)
    Bp = TB * n_tiles
    return TB, Bp, n_tiles


def net_detection_forward(x, params, *, tb=4096):
    """x: [B, 50] float32.  params: dict of w1,b1,w2,b2,w3,b3 (W stored (in,out))."""
    f32 = jnp.float32
    bf16 = jnp.bfloat16

    in_dim = params["w1"].shape[0]      # 50
    h1_dim = params["w1"].shape[1]      # 500
    h2_dim = params["w2"].shape[1]      # 100
    out_dim = params["w3"].shape[1]     # 1

    # Lane-aligned padded feature dims (padded entries are exact zeros, so
    # they never contribute to the math).
    h1p = _round_up(h1_dim, 128)        # 512
    h2p = _round_up(h2_dim, 128)        # 128

    w1 = jnp.zeros((in_dim, h1p), bf16).at[:, :h1_dim].set(
        params["w1"].astype(bf16))                       # (50, 512)
    b1 = jnp.zeros((1, h1p), f32).at[:, :h1_dim].set(
        params["b1"].astype(f32))                        # (1, 512)
    w2 = jnp.zeros((h1p, h2p), bf16).at[:h1_dim, :h2_dim].set(
        params["w2"].astype(bf16))                       # (512, 128)
    b2 = jnp.zeros((1, h2p), f32).at[:, :h2_dim].set(
        params["b2"].astype(f32))                        # (1, 128)
    w3 = jnp.zeros((1, h2p), f32).at[:, :h2_dim].set(
        params["w3"].T.astype(f32))                      # (1, 128) -- VPU row
    b3 = params["b3"].astype(f32)                        # (1, 1)

    B, F = x.shape
    TB, Bp, n_tiles = _choose_tiles(B, tb)
    if Bp != B:
        # Only the small tail is zero rows; padded rows are sliced off below.
        x = jnp.pad(x, ((0, Bp - B), (0, 0)))
    x = x.astype(f32)                                    # cast to bf16 happens in-kernel

    def _resident(arr):
        # Full-array block, constant block index -> fetched once, stays in VMEM.
        return pl.BlockSpec(arr.shape, lambda i: (0, 0))

    out = pl.pallas_call(
        mlp_kernel,
        out_shape=jax.ShapeDtypeStruct((Bp, out_dim), f32),
        grid=(n_tiles,),
        in_specs=[
            pl.BlockSpec((TB, F), lambda i: (i, 0)),     # x: batch-tiled, pipelined
            _resident(w1), _resident(b1),
            _resident(w2), _resident(b2),
            _resident(w3), _resident(b3),
        ],
        out_specs=pl.BlockSpec((TB, out_dim), lambda i: (i, 0)),
        compiler_params=pltpu.CompilerParams(
            dimension_semantics=("parallel",),           # megacore on v7x
            vmem_limit_bytes=32 * 1024 * 1024,           # safe on v5e/v6e/v7x at TB<=4096
        ),
    )(x, w1, b1, w2, b2, w3, b3)

    return out[:B] if Bp != B else out


def init_params(key):
    """Deterministic init mimicking PyTorch's default Linear init
    (uniform(-1/sqrt(fan_in), 1/sqrt(fan_in)) for weight and bias)."""
    dims = [(50, 500), (500, 100), (100, 1)]
    params = {}
    keys = jax.random.split(key, 2 * len(dims))
    for i, (fan_in, fan_out) in enumerate(dims):
        bound = 1.0 / math.sqrt(fan_in)
        params[f"w{i + 1}"] = jax.random.uniform(
            keys[2 * i], (fan_in, fan_out), jnp.float32, -bound, bound)
        params[f"b{i + 1}"] = jax.random.uniform(
            keys[2 * i + 1], (1, fan_out), jnp.float32, -bound, bound)
    return params


def reference_forward_f32(x, params):
    h = jnp.maximum(x @ params["w1"] + params["b1"], 0.0)
    h = jnp.maximum(h @ params["w2"] + params["b2"], 0.0)
    h = jnp.maximum(h @ params["w3"] + params["b3"], 0.0)
    return h


def reference_forward_bf16(x, params):
    # Same numerics as the kernel: bf16 matmul inputs, f32 accumulation,
    # bf16 h1 carried into fc2.
    h = jnp.dot(x.astype(jnp.bfloat16), params["w1"].astype(jnp.bfloat16),
                preferred_element_type=jnp.float32)
    h = jnp.maximum(h + params["b1"], 0.0).astype(jnp.bfloat16)
    h = jnp.dot(h, params["w2"].astype(jnp.bfloat16),
                preferred_element_type=jnp.float32)
    h = jnp.maximum(h + params["b2"], 0.0)
    h = jnp.maximum(h @ params["w3"] + params["b3"], 0.0)
    return h


if __name__ == "__main__":
    key = jax.random.PRNGKey(0)
    pkey, xkey = jax.random.split(key)
    params = init_params(pkey)

    batch = 8
    x = jax.random.normal(xkey, (batch, 50), jnp.float32)

    out = net_detection_forward(x, params)
    out = jax.block_until_ready(out)
    assert out.shape == (batch, 1), out.shape

    # Strict check vs a bf16-matched reference (same matmul precision).
    ref_bf16 = reference_forward_bf16(x, params)
    assert jnp.allclose(out, ref_bf16, atol=2e-3, rtol=2e-3), "mismatch vs bf16 reference"

    # Loose sanity check vs the pure-f32 PyTorch-equivalent reference.
    ref_f32 = reference_forward_f32(x, params)
    assert jnp.allclose(out, ref_f32, atol=5e-2, rtol=5e-2), "mismatch vs f32 reference"

    # Exercise a batch that is not tile-aligned (adaptive TB + tail padding).
    x2 = jax.random.normal(jax.random.PRNGKey(1), (4100, 50), jnp.float32)
    out2 = jax.block_until_ready(net_detection_forward(x2, params))
    ref2 = reference_forward_bf16(x2, params)
    assert out2.shape == (4100, 1)
    assert jnp.allclose(out2, ref2, atol=2e-3, rtol=2e-3), "mismatch on large batch"

    print("KERNEL_OK")
</pallas_src>

<mosaic_0001>
module attributes {stable_mosaic.version = 11 : i64} {
  func.func @mlp_kernel(%arg0: i32, %arg1: memref<8x50xf32, #tpu.memory_space<vmem>>, %arg2: memref<50x512xbf16, #tpu.memory_space<vmem>>, %arg3: memref<1x512xf32, #tpu.memory_space<vmem>>, %arg4: memref<512x128xbf16, #tpu.memory_space<vmem>>, %arg5: memref<1x128xf32, #tpu.memory_space<vmem>>, %arg6: memref<1x128xf32, #tpu.memory_space<vmem>>, %arg7: memref<1x1xf32, #tpu.memory_space<vmem>>, %arg8: memref<8x1xf32, #tpu.memory_space<vmem>>) attributes {dimension_semantics = [#tpu.dimension_semantics<parallel>], iteration_bounds = array<i64: 1>, scalar_prefetch = 0 : i64, scratch_operands = 0 : i64, tpu.core_type = #tpu.core_type<tc>, window_params = [{transform_indices = @transform_0, window_bounds = array<i64: 8, 50>}, {pipeline_mode = #tpu.pipeline_mode<synchronous>, transform_indices = @transform_1, window_bounds = array<i64: 50, 512>}, {pipeline_mode = #tpu.pipeline_mode<synchronous>, transform_indices = @transform_2, window_bounds = array<i64: 1, 512>}, {pipeline_mode = #tpu.pipeline_mode<synchronous>, transform_indices = @transform_3, window_bounds = array<i64: 512, 128>}, {pipeline_mode = #tpu.pipeline_mode<synchronous>, transform_indices = @transform_4, window_bounds = array<i64: 1, 128>}, {pipeline_mode = #tpu.pipeline_mode<synchronous>, transform_indices = @transform_5, window_bounds = array<i64: 1, 128>}, {pipeline_mode = #tpu.pipeline_mode<synchronous>, transform_indices = @transform_6, window_bounds = array<i64: 1, 1>}, {transform_indices = @transform_7, window_bounds = array<i64: 8, 1>}]} {
    %c0 = arith.constant 0 : index
    %c0_0 = arith.constant 0 : index
    %0 = vector.load %arg1[%c0, %c0_0] : memref<8x50xf32, #tpu.memory_space<vmem>>, vector<8x50xf32>
    %1 = arith.truncf %0 : vector<8x50xf32> to vector<8x50xbf16>
    %c0_1 = arith.constant 0 : index
    %c0_2 = arith.constant 0 : index
    %2 = vector.load %arg2[%c0_1, %c0_2] : memref<50x512xbf16, #tpu.memory_space<vmem>>, vector<50x512xbf16>
    %cst = arith.constant dense<0.000000e+00> : vector<8x512xf32>
    %3 = tpu.matmul %1, %2, %cst {dimension_numbers = #tpu.dot_dimension_numbers<[1], [0], [0], [1], [0, 0, 1, 1], [], []>} : vector<8x50xbf16>, vector<50x512xbf16>, vector<8x512xf32> -> vector<8x512xf32>
    %c0_3 = arith.constant 0 : index
    %c0_4 = arith.constant 0 : index
    %4 = vector.load %arg3[%c0_3, %c0_4] : memref<1x512xf32, #tpu.memory_space<vmem>>, vector<1x512xf32>
    %5 = vector.broadcast %4 : vector<1x512xf32> to vector<8x512xf32>
    %6 = arith.addf %3, %5 : vector<8x512xf32>
    %cst_5 = arith.constant 0.000000e+00 : f32
    %7 = vector.broadcast %cst_5 : f32 to vector<8x512xf32>
    %8 = arith.maximumf %6, %7 : vector<8x512xf32>
    %9 = arith.truncf %8 : vector<8x512xf32> to vector<8x512xbf16>
    %c0_6 = arith.constant 0 : index
    %c0_7 = arith.constant 0 : index
    %10 = vector.load %arg4[%c0_6, %c0_7] : memref<512x128xbf16, #tpu.memory_space<vmem>>, vector<512x128xbf16>
    %cst_8 = arith.constant dense<0.000000e+00> : vector<8x128xf32>
    %11 = tpu.matmul %9, %10, %cst_8 {dimension_numbers = #tpu.dot_dimension_numbers<[1], [0], [0], [1], [0, 0, 1, 1], [], []>} : vector<8x512xbf16>, vector<512x128xbf16>, vector<8x128xf32> -> vector<8x128xf32>
    %c0_9 = arith.constant 0 : index
    %c0_10 = arith.constant 0 : index
    %12 = vector.load %arg5[%c0_9, %c0_10] : memref<1x128xf32, #tpu.memory_space<vmem>>, vector<1x128xf32>
    %13 = vector.broadcast %12 : vector<1x128xf32> to vector<8x128xf32>
    %14 = arith.addf %11, %13 : vector<8x128xf32>
    %cst_11 = arith.constant 0.000000e+00 : f32
    %15 = vector.broadcast %cst_11 : f32 to vector<8x128xf32>
    %16 = arith.maximumf %14, %15 : vector<8x128xf32>
    %c0_12 = arith.constant 0 : index
    %c0_13 = arith.constant 0 : index
    %17 = vector.load %arg6[%c0_12, %c0_13] : memref<1x128xf32, #tpu.memory_space<vmem>>, vector<1x128xf32>
    %18 = vector.broadcast %17 : vector<1x128xf32> to vector<8x128xf32>
    %19 = arith.mulf %16, %18 : vector<8x128xf32>
    %cst_14 = arith.constant dense<0.000000e+00> : vector<8xf32>
    %20 = vector.multi_reduction <add>, %19, %cst_14 [1] : vector<8x128xf32> to vector<8xf32>
    %21 = vector.shape_cast %20 : vector<8xf32> to vector<8x1xf32>
    %c0_15 = arith.constant 0 : index
    %c0_16 = arith.constant 0 : index
    %22 = vector.load %arg7[%c0_15, %c0_16] : memref<1x1xf32, #tpu.memory_space<vmem>>, vector<1x1xf32>
    %23 = vector.broadcast %22 : vector<1x1xf32> to vector<8x1xf32>
    %24 = arith.addf %21, %23 : vector<8x1xf32>
    %cst_17 = arith.constant 0.000000e+00 : f32
    %25 = vector.broadcast %cst_17 : f32 to vector<8x1xf32>
    %26 = arith.maximumf %24, %25 : vector<8x1xf32>
    %c0_18 = arith.constant 0 : index
    %c0_19 = arith.constant 0 : index
    %27 = vector.load %arg8[%c0_18, %c0_19] : memref<8x1xf32, #tpu.memory_space<vmem>>, vector<8x1xf32>
    tpu.vector_store %arg8[%c0_18, %c0_19], %26 {strides = array<i32>} : memref<8x1xf32, #tpu.memory_space<vmem>>, vector<8x1xf32>,
    return
  }
  func.func @transform_0(%arg0: i32) -> (i32, i32) {
    %c0_i32 = arith.constant 0 : i32
    %c0_i32_0 = arith.constant 0 : i32
    return %arg0, %c0_i32 : i32, i32
  }
  func.func @transform_1(%arg0: i32) -> (i32, i32) {
    %c0_i32 = arith.constant 0 : i32
    %c0_i32_0 = arith.constant 0 : i32
    %c0_i32_1 = arith.constant 0 : i32
    return %c0_i32, %c0_i32_0 : i32, i32
  }
  func.func @transform_2(%arg0: i32) -> (i32, i32) {
    %c0_i32 = arith.constant 0 : i32
    %c0_i32_0 = arith.constant 0 : i32
    %c0_i32_1 = arith.constant 0 : i32
    return %c0_i32, %c0_i32_0 : i32, i32
  }
  func.func @transform_3(%arg0: i32) -> (i32, i32) {
    %c0_i32 = arith.constant 0 : i32
    %c0_i32_0 = arith.constant 0 : i32
    %c0_i32_1 = arith.constant 0 : i32
    return %c0_i32, %c0_i32_0 : i32, i32
  }
  func.func @transform_4(%arg0: i32) -> (i32, i32) {
    %c0_i32 = arith.constant 0 : i32
    %c0_i32_0 = arith.constant 0 : i32
    %c0_i32_1 = arith.constant 0 : i32
    return %c0_i32, %c0_i32_0 : i32, i32
  }
  func.func @transform_5(%arg0: i32) -> (i32, i32) {
    %c0_i32 = arith.constant 0 : i32
    %c0_i32_0 = arith.constant 0 : i32
    %c0_i32_1 = arith.constant 0 : i32
    return %c0_i32, %c0_i32_0 : i32, i32
  }
  func.func @transform_6(%arg0: i32) -> (i32, i32) {
    %c0_i32 = arith.constant 0 : i32
    %c0_i32_0 = arith.constant 0 : i32
    %c0_i32_1 = arith.constant 0 : i32
    return %c0_i32, %c0_i32_0 : i32, i32
  }
  func.func @transform_7(%arg0: i32) -> (i32, i32) {
    %c0_i32 = arith.constant 0 : i32
    %c0_i32_0 = arith.constant 0 : i32
    return %arg0, %c0_i32 : i32, i32
  }
}

</mosaic_0001>

<llo_original>
// kernel: tpu_custom_call.1
$region0: #{tpu_custom_call.1}
  #allocation0 [shape = 'u32[]', space=smem, size = 0x4, offset = 0x4, fixed_abs, tag = 'smem constant byte address 0x4 - core index']
  #allocation1 [shape = 'u32[72,128]{1,0:T(1,128)}', space=vmem, size = 0x9000, scoped, tag = 'internal scratch']
  #allocation2 [shape = 'f32[1,1]{1,0:T(1,128)S(1)}', space=vmem, size = 0x200, scoped, tag = 'scoped memory for tpu_custom_call.1']
  %s0 = inlined_call_operand.hbm [shape: f32[8,50], index: 0, kind: input, shape index: {}]
  %s1 = inlined_call_operand.hbm [shape: bf16[50,512], index: 1, kind: input, shape index: {}]
  %s2 = inlined_call_operand.hbm [shape: f32[1,512], index: 2, kind: input, shape index: {}]
  %s3 = inlined_call_operand.hbm [shape: bf16[512,128], index: 3, kind: input, shape index: {}]
  %s4 = inlined_call_operand.vmem [shape: f32[1,128], index: 4, kind: input, shape index: {}]
  %s5 = inlined_call_operand.vmem [shape: f32[1,128], index: 5, kind: input, shape index: {}]
  %s6 = inlined_call_operand.<no memory space> [shape: f32[1,1], index: 6, kind: input, shape index: {}]
  %s7 = inlined_call_operand.vmem [shape: f32[8,1], index: 7, kind: output, shape index: {}]
  %s8 = sld [smem:[#allocation0]]
  $region54: #{tpu_custom_call.1} parent=0
    _
  %s10 = ssub.s32 1, %s8
  %s11 = scalar_select 0, %s10, %s8
  %v12 = vstv %s6
  %13 = vst [vmem:[#allocation2] sm:$0x1] %v12
  $region1: #{tpu_custom_call.1} parent=0
    #allocation3 [shape = 'u8[4096]{0}', space=vmem, size = 0x1000, scoped, tag = 'input window, operand 0, single buffered']
    #allocation4 [shape = 's32[1]{0}', space=sflag, size = 0x4, scoped, tag = 'scoped memory for tpu_custom_call.1']
    #allocation5 [shape = 'u8[57344]{0}', space=vmem, size = 0xe000, scoped, tag = 'input window, operand 1, single buffered']
    #allocation6 [shape = 's32[1]{0}', space=sflag, size = 0x4, scoped, tag = 'scoped memory for tpu_custom_call.1']
    #allocation7 [shape = 'u8[2048]{0}', space=vmem, size = 0x800, scoped, tag = 'input window, operand 2, single buffered']
    #allocation8 [shape = 'u8[131072]{0}', space=vmem, size = 0x20000, scoped, tag = 'input window, operand 3, single buffered']
    #allocation9 [shape = 's32[1]{0}', space=sflag, size = 0x4, scoped, tag = 'scoped memory for tpu_custom_call.1']
    %14 = vsyncpa [#allocation4], 0
    %15 = vsyncpa [#allocation6], 0
    %16 = vsyncpa [#allocation9], 0
    // Predicated region
    $region2: #{tpu_custom_call.1} parent=1 // pred_check
      _
    $region3: #{tpu_custom_call.1} parent=1 // pred_check_branch
      %18 = sbr.rel (0) target = $region5
    $region4: #{tpu_custom_call.1} parent=1 // pred_region
      %20 = vsyncadd [#allocation4], 0
      %s22 = sshll.u32 %s0, 4
      %s23 = int_to_ptr.hbm [resolvable:$true] %s22
      %s24 = sshll.u32 [#allocation3], 4
      %s25 = int_to_ptr.vmem [resolvable:$true] %s24
      %27 = dma.hbm_to_vmem [thread:$0]  %s23, 128, %s25, [#allocation4]
    $region5: #{tpu_custom_call.1} parent=1 // pred_fallthru
      _
    // Predicated region
    $region6: #{tpu_custom_call.1} parent=1 // pred_check
      _
    $region7: #{tpu_custom_call.1} parent=1 // pred_check_branch
      %29 = sbr.rel (0) target = $region9
    $region8: #{tpu_custom_call.1} parent=1 // pred_region
      %31 = vsyncadd [#allocation6], 0
      %s32 = sshll.u32 %s1, 4
      %s33 = int_to_ptr.hbm [resolvable:$true] %s32
      %s34 = sshll.u32 [#allocation5], 4
      %s35 = int_to_ptr.vmem [resolvable:$true] %s34
      %40 = dma.hbm_to_vmem [thread:$0]  %s33, 1792, %s35, [#allocation6], 256, 256, 16
    $region9: #{tpu_custom_call.1} parent=1 // pred_fallthru
      _
    // Predicated region
    $region10: #{tpu_custom_call.1} parent=1 // pred_check
      _
    $region11: #{tpu_custom_call.1} parent=1 // pred_check_branch
      %42 = sbr.rel (0) target = $region13
    $region12: #{tpu_custom_call.1} parent=1 // pred_region
      %44 = vsyncadd [#allocation6], 0
      %s46 = sshll.u32 %s2, 4
      %s47 = int_to_ptr.hbm [resolvable:$true] %s46
      %s48 = sshll.u32 [#allocation7], 4
      %s49 = int_to_ptr.vmem [resolvable:$true] %s48
      %51 = dma.hbm_to_vmem [thread:$0]  %s47, 64, %s49, [#allocation6]
    $region13: #{tpu_custom_call.1} parent=1 // pred_fallthru
      _
    // Predicated region
    $region14: #{tpu_custom_call.1} parent=1 // pred_check
      _
    $region15: #{tpu_custom_call.1} parent=1 // pred_check_branch
      %53 = sbr.rel (0) target = $region17
    $region16: #{tpu_custom_call.1} parent=1 // pred_region
      %55 = vsyncadd [#allocation9], 0
      %s56 = sshll.u32 %s3, 4
      %s57 = int_to_ptr.hbm [resolvable:$true] %s56
      %s58 = sshll.u32 [#allocation8], 4
      %s59 = int_to_ptr.vmem [resolvable:$true] %s58
      %64 = dma.hbm_to_vmem [thread:$0]  %s57, 4096, %s59, [#allocation9], 64, 64, 4
    $region17: #{tpu_custom_call.1} parent=1 // pred_fallthru
      _
    // Predicated region
    $region18: #{tpu_custom_call.1} parent=1 // pred_check
      _
    $region19: #{tpu_custom_call.1} parent=1 // pred_check_branch
      %66 = sbr.rel (0) target = $region21
    $region20: #{tpu_custom_call.1} parent=1 // pred_region
      _
    $region21: #{tpu_custom_call.1} parent=1 // pred_fallthru
      _
    // Predicated region
    $region22: #{tpu_custom_call.1} parent=1 // pred_check
      _
    $region23: #{tpu_custom_call.1} parent=1 // pred_check_branch
      %68 = sbr.rel (0) target = $region25
    $region24: #{tpu_custom_call.1} parent=1 // pred_region
      _
    $region25: #{tpu_custom_call.1} parent=1 // pred_fallthru
      _
    // Predicated region
    $region26: #{tpu_custom_call.1} parent=1 // pred_check
      _
    $region27: #{tpu_custom_call.1} parent=1 // pred_check_branch
      %70 = sbr.rel (0) target = $region29
    $region28: #{tpu_custom_call.1} parent=1 // pred_region
      _
    $region29: #{tpu_custom_call.1} parent=1 // pred_fallthru
      _
    // Predicated region
    $region30: #{tpu_custom_call.1} parent=1 // pred_check
      _
    $region31: #{tpu_custom_call.1} parent=1 // pred_check_branch
      %72 = sbr.rel (0) target = $region33
    $region32: #{tpu_custom_call.1} parent=1 // pred_region
      %74 = dma.done [#allocation4], 128
    $region33: #{tpu_custom_call.1} parent=1 // pred_fallthru
      _
    // Predicated region
    $region34: #{tpu_custom_call.1} parent=1 // pred_check
      _
    $region35: #{tpu_custom_call.1} parent=1 // pred_check_branch
      %76 = sbr.rel (0) target = $region37
    $region36: #{tpu_custom_call.1} parent=1 // pred_region
      %78 = dma.done [#allocation6], 1792
    $region37: #{tpu_custom_call.1} parent=1 // pred_fallthru
      _
    // Predicated region
    $region38: #{tpu_custom_call.1} parent=1 // pred_check
      _
    $region39: #{tpu_custom_call.1} parent=1 // pred_check_branch
      %80 = sbr.rel (0) target = $region41
    $region40: #{tpu_custom_call.1} parent=1 // pred_region
      %82 = dma.done [#allocation6], 64
    $region41: #{tpu_custom_call.1} parent=1 // pred_fallthru
      _
    // Predicated region
    $region42: #{tpu_custom_call.1} parent=1 // pred_check
      _
    $region43: #{tpu_custom_call.1} parent=1 // pred_check_branch
      %84 = sbr.rel (0) target = $region45
    $region44: #{tpu_custom_call.1} parent=1 // pred_region
      %86 = dma.done [#allocation9], 4096
    $region45: #{tpu_custom_call.1} parent=1 // pred_fallthru
      _
    %v88 = vld [vmem:[#allocation3] sm:$0xff]
    %v89 = vpack.c.bf16 %v88, %v88
    %v90 = vld [vmem:[#allocation5] sm:$0xff]
    %v91 = vld [vmem:[#allocation5 + $0x8] sm:$0xff]
    %v92 = vld [vmem:[#allocation5 + $0x10] sm:$0xff]
    %v93 = vld [vmem:[#allocation5 + $0x18] sm:$0xff]
    %v94 = vld [vmem:[#allocation5 + $0x20] sm:$0xff]
    %v95 = vld [vmem:[#allocation5 + $0x28] sm:$0xff]
    %v96 = vld [vmem:[#allocation5 + $0x30] sm:$0xff]
    %v97 = vld [vmem:[#allocation5 + $0x38] sm:$0xff]
    %v98 = vld [vmem:[#allocation5 + $0x40] sm:$0xff]
    %v99 = vld [vmem:[#allocation5 + $0x48] sm:$0xff]
    %v100 = vld [vmem:[#allocation5 + $0x50] sm:$0xff]
    %v101 = vld [vmem:[#allocation5 + $0x58] sm:$0xff]
    %v102 = vld [vmem:[#allocation5 + $0x60] sm:$0x11]
    %v103 = vld [vmem:[#allocation5 + $0x68] sm:$0x11]
    %v104 = vld [vmem:[#allocation7] sm:$0xf]
    %v106 = vperm.slane %v104, 0
    %v107 = vperm.slane %v104, 1
    %v108 = vperm.slane %v104, 2
    %v109 = vperm.slane %v104, 3
    %v128 = vunpack.c.l.b16 %v90
    %v129 = vunpack.c.h.b16 %v90
    %v130 = vunpack.c.l.b16 %v91
    %v131 = vunpack.c.h.b16 %v91
    %v132 = vunpack.c.l.b16 %v92
    %v133 = vunpack.c.h.b16 %v92
    %v134 = vunpack.c.l.b16 %v93
    %v135 = vunpack.c.h.b16 %v93
    %v136 = vunpack.c.l.b16 %v94
    %v137 = vunpack.c.h.b16 %v94
    %v138 = vunpack.c.l.b16 %v95
    %v139 = vunpack.c.h.b16 %v95
    %v140 = vunpack.c.l.b16 %v96
    %v141 = vunpack.c.h.b16 %v96
    %v142 = vunpack.c.l.b16 %v97
    %v143 = vunpack.c.h.b16 %v97
    %v144 = vunpack.c.l.b16 %v98
    %v145 = vunpack.c.h.b16 %v98
    %v146 = vunpack.c.l.b16 %v99
    %v147 = vunpack.c.h.b16 %v99
    %v148 = vunpack.c.l.b16 %v100
    %v149 = vunpack.c.h.b16 %v100
    %v150 = vunpack.c.l.b16 %v101
    %v151 = vunpack.c.h.b16 %v101
    %v152 = vunpack.c.l.b16 %v102
    %v153 = vunpack.c.h.b16 %v102
    %v154 = vunpack.c.l.b16 %v103
    %v155 = vunpack.c.h.b16 %v103
    %v156 = vpack.c.b16 %v132, %v128
    %v157 = vpack.c.b16 %v133, %v129
    %v158 = vpack.c.b16 %v134, %v130
    %v159 = vpack.c.b16 %v135, %v131
    %v160 = vpack.c.b16 %v140, %v136
    %v161 = vpack.c.b16 %v141, %v137
    %v162 = vpack.c.b16 %v142, %v138
    %v163 = vpack.c.b16 %v143, %v139
    %v164 = vpack.c.b16 %v148, %v144
    %v165 = vpack.c.b16 %v149, %v145
    %v166 = vpack.c.b16 %v150, %v146
    %v167 = vpack.c.b16 %v151, %v147
    %v168 = vpack.c.b16 %v152, %v152
    %v169 = vpack.c.b16 %v153, %v153
    %v170 = vpack.c.b16 %v154, %v154
    %v171 = vpack.c.b16 %v155, %v155
    %vm184 = vcmask 408576
    %v186 = vsel %vm184, %v89, 0
    %vm188 = vcmask 1040384
    %v190 = vsel %vm188, %v168, 0
    %v193 = vsel %vm188, %v169, 0
    %v196 = vsel %vm188, %v170, 0
    %v199 = vsel %vm188, %v171, 0
    %201 = vmatpush.bf16.msra.mxu0 0
    %202 = vmatpush.bf16.msra.mxu0 0
    %203 = vmatpush.bf16.msra.mxu0 0
    %204 = vmatpush.bf16.msra.mxu0 0
    %205 = vmatpush.bf16.msra.mxu0 %v190
    %206 = vmatpush.bf16.msra.mxu0 %v164
    %207 = vmatpush.bf16.msra.mxu0 %v160
    %208 = vmatpush.bf16.msra.mxu0 %v156
    %209 = vmatmul.bf16.gmra.mxu0 %v186
    %v210 = vpop.f32.mrf.mxu0
    %v211 = vadd.f32 %v106, %v210
    %v212 = vpop.f32.mrf.mxu0
    %213 = vdwg.mxu0
    %214 = vmatpush.bf16.msra.mxu0 0
    %215 = vmatpush.bf16.msra.mxu0 0
    %216 = vmatpush.bf16.msra.mxu0 0
    %217 = vmatpush.bf16.msra.mxu0 0
    %218 = vmatpush.bf16.msra.mxu0 %v193
    %219 = vmatpush.bf16.msra.mxu0 %v165
    %220 = vmatpush.bf16.msra.mxu0 %v161
    %221 = vmatpush.bf16.msra.mxu0 %v157
    %222 = vmatmul.bf16.gmra.mxu0 %v186
    %v223 = vpop.f32.mrf.mxu0
    %v224 = vadd.f32 %v107, %v223
    %v225 = vpop.f32.mrf.mxu0
    %226 = vdwg.mxu0
    %227 = vmatpush.bf16.msra.mxu0 0
    %228 = vmatpush.bf16.msra.mxu0 0
    %229 = vmatpush.bf16.msra.mxu0 0
    %230 = vmatpush.bf16.msra.mxu0 0
    %231 = vmatpush.bf16.msra.mxu0 %v196
    %232 = vmatpush.bf16.msra.mxu0 %v166
    %233 = vmatpush.bf16.msra.mxu0 %v162
    %234 = vmatpush.bf16.msra.mxu0 %v158
    %235 = vmatmul.bf16.gmra.mxu0 %v186
    %v236 = vpop.f32.mrf.mxu0
    %v237 = vadd.f32 %v108, %v236
    %v238 = vpop.f32.mrf.mxu0
    %239 = vdwg.mxu0
    %240 = vmatpush.bf16.msra.mxu0 0
    %241 = vmatpush.bf16.msra.mxu0 0
    %242 = vmatpush.bf16.msra.mxu0 0
    %243 = vmatpush.bf16.msra.mxu0 0
    %244 = vmatpush.bf16.msra.mxu0 %v199
    %245 = vmatpush.bf16.msra.mxu0 %v167
    %246 = vmatpush.bf16.msra.mxu0 %v163
    %247 = vmatpush.bf16.msra.mxu0 %v159
    %248 = vmatmul.bf16.gmra.mxu0 %v186
    %v249 = vpop.f32.mrf.mxu0
    %v250 = vadd.f32 %v109, %v249
    %v251 = vpop.f32.mrf.mxu0
    %252 = vdwg.mxu0
    %v253 = vmax.f32 %v211, 0.0
    %v254 = vmax.f32 %v224, 0.0
    %v255 = vmax.f32 %v237, 0.0
    %v256 = vmax.f32 %v250, 0.0
    %v257 = vpack.c.bf16 %v253, %v253
    %v258 = vpack.c.bf16 %v254, %v254
    %v259 = vpack.c.bf16 %v255, %v255
    %v260 = vpack.c.bf16 %v256, %v256
    %v261 = vld [vmem:[#allocation8] sm:$0xf]
    %v262 = vld [vmem:[#allocation8 + $0x4] sm:$0xf]
    %v263 = vld [vmem:[#allocation8 + $0x8] sm:$0xf]
    %v264 = vld [vmem:[#allocation8 + $0xc] sm:$0xf]
    %v265 = vld [vmem:[#allocation8 + $0x10] sm:$0xf]
    %v266 = vld [vmem:[#allocation8 + $0x14] sm:$0xf]
    %v267 = vld [vmem:[#allocation8 + $0x18] sm:$0xf]
    %v268 = vld [vmem:[#allocation8 + $0x1c] sm:$0xf]
    %v269 = vld [vmem:[#allocation8 + $0x20] sm:$0xf]
    %v270 = vld [vmem:[#allocation8 + $0x24] sm:$0xf]
    %v271 = vld [vmem:[#allocation8 + $0x28] sm:$0xf]
    %v272 = vld [vmem:[#allocation8 + $0x2c] sm:$0xf]
    %v273 = vld [vmem:[#allocation8 + $0x30] sm:$0xf]
    %v274 = vld [vmem:[#allocation8 + $0x34] sm:$0xf]
    %v275 = vld [vmem:[#allocation8 + $0x38] sm:$0xf]
    %v276 = vld [vmem:[#allocation8 + $0x3c] sm:$0xf]
    %v277 = vld [vmem:[#allocation8 + $0x40] sm:$0xf]
    %v278 = vld [vmem:[#allocation8 + $0x44] sm:$0xf]
    %v279 = vld [vmem:[#allocation8 + $0x48] sm:$0xf]
    %v280 = vld [vmem:[#allocation8 + $0x4c] sm:$0xf]
    %v281 = vld [vmem:[#allocation8 + $0x50] sm:$0xf]
    %v282 = vld [vmem:[#allocation8 + $0x54] sm:$0xf]
    %v283 = vld [vmem:[#allocation8 + $0x58] sm:$0xf]
    %v284 = vld [vmem:[#allocation8 + $0x5c] sm:$0xf]
    %v285 = vld [vmem:[#allocation8 + $0x60] sm:$0xf]
    %v286 = vld [vmem:[#allocation8 + $0x64] sm:$0xf]
    %v287 = vld [vmem:[#allocation8 + $0x68] sm:$0xf]
    %v288 = vld [vmem:[#allocation8 + $0x6c] sm:$0xf]
    %v289 = vld [vmem:[#allocation8 + $0x70] sm:$0xf]
    %v290 = vld [vmem:[#allocation8 + $0x74] sm:$0xf]
    %v291 = vld [vmem:[#allocation8 + $0x78] sm:$0xf]
    %v292 = vld [vmem:[#allocation8 + $0x7c] sm:$0xf]
    %v293 = vld [vmem:[#allocation8 + $0x80] sm:$0xf]
    %v294 = vld [vmem:[#allocation8 + $0x84] sm:$0xf]
    %v295 = vld [vmem:[#allocation8 + $0x88] sm:$0xf]
    %v296 = vld [vmem:[#allocation8 + $0x8c] sm:$0xf]
    %v297 = vld [vmem:[#allocation8 + $0x90] sm:$0xf]
    %v298 = vld [vmem:[#allocation8 + $0x94] sm:$0xf]
    %v299 = vld [vmem:[#allocation8 + $0x98] sm:$0xf]
    %v300 = vld [vmem:[#allocation8 + $0x9c] sm:$0xf]
    %v301 = vld [vmem:[#allocation8 + $0xa0] sm:$0xf]
    %v302 = vld [vmem:[#allocation8 + $0xa4] sm:$0xf]
    %v303 = vld [vmem:[#allocation8 + $0xa8] sm:$0xf]
    %v304 = vld [vmem:[#allocation8 + $0xac] sm:$0xf]
    %v305 = vld [vmem:[#allocation8 + $0xb0] sm:$0xf]
    %v306 = vld [vmem:[#allocation8 + $0xb4] sm:$0xf]
    %v307 = vld [vmem:[#allocation8 + $0xb8] sm:$0xf]
    %v308 = vld [vmem:[#allocation8 + $0xbc] sm:$0xf]
    %v309 = vld [vmem:[#allocation8 + $0xc0] sm:$0xf]
    %v310 = vld [vmem:[#allocation8 + $0xc4] sm:$0xf]
    %v311 = vld [vmem:[#allocation8 + $0xc8] sm:$0xf]
    %v312 = vld [vmem:[#allocation8 + $0xcc] sm:$0xf]
    %v313 = vld [vmem:[#allocation8 + $0xd0] sm:$0xf]
    %v314 = vld [vmem:[#allocation8 + $0xd4] sm:$0xf]
    %v315 = vld [vmem:[#allocation8 + $0xd8] sm:$0xf]
    %v316 = vld [vmem:[#allocation8 + $0xdc] sm:$0xf]
    %v317 = vld [vmem:[#allocation8 + $0xe0] sm:$0xf]
    %v318 = vld [vmem:[#allocation8 + $0xe4] sm:$0xf]
    %v319 = vld [vmem:[#allocation8 + $0xe8] sm:$0xf]
    %v320 = vld [vmem:[#allocation8 + $0xec] sm:$0xf]
    %v321 = vld [vmem:[#allocation8 + $0xf0] sm:$0xf]
    %v322 = vld [vmem:[#allocation8 + $0xf4] sm:$0xf]
    %v323 = vld [vmem:[#allocation8 + $0xf8] sm:$0xf]
    %v324 = vld [vmem:[#allocation8 + $0xfc] sm:$0xf]
    %v325 = vld [vmem:[%s4] sm:$0x1]
    %v327 = vperm.slane %v325, 0
    %v393 = vunpack.c.l.b16 %v261
    %v394 = vunpack.c.l.b16 %v262
    %v395 = vunpack.c.l.b16 %v263
    %v396 = vunpack.c.l.b16 %v264
    %v397 = vunpack.c.l.b16 %v265
    %v398 = vunpack.c.l.b16 %v266
    %v399 = vunpack.c.l.b16 %v267
    %v400 = vunpack.c.l.b16 %v268
    %v401 = vunpack.c.l.b16 %v269
    %v402 = vunpack.c.l.b16 %v270
    %v403 = vunpack.c.l.b16 %v271
    %v404 = vunpack.c.l.b16 %v272
    %v405 = vunpack.c.l.b16 %v273
    %v406 = vunpack.c.l.b16 %v274
    %v407 = vunpack.c.l.b16 %v275
    %v408 = vunpack.c.l.b16 %v276
    %v409 = vunpack.c.l.b16 %v277
    %v410 = vunpack.c.l.b16 %v278
    %v411 = vunpack.c.l.b16 %v279
    %v412 = vunpack.c.l.b16 %v280
    %v413 = vunpack.c.l.b16 %v281
    %v414 = vunpack.c.l.b16 %v282
    %v415 = vunpack.c.l.b16 %v283
    %v416 = vunpack.c.l.b16 %v284
    %v417 = vunpack.c.l.b16 %v285
    %v418 = vunpack.c.l.b16 %v286
    %v419 = vunpack.c.l.b16 %v287
    %v420 = vunpack.c.l.b16 %v288
    %v421 = vunpack.c.l.b16 %v289
    %v422 = vunpack.c.l.b16 %v290
    %v423 = vunpack.c.l.b16 %v291
    %v424 = vunpack.c.l.b16 %v292
    %v425 = vunpack.c.l.b16 %v293
    %v426 = vunpack.c.l.b16 %v294
    %v427 = vunpack.c.l.b16 %v295
    %v428 = vunpack.c.l.b16 %v296
    %v429 = vunpack.c.l.b16 %v297
    %v430 = vunpack.c.l.b16 %v298
    %v431 = vunpack.c.l.b16 %v299
    %v432 = vunpack.c.l.b16 %v300
    %v433 = vunpack.c.l.b16 %v301
    %v434 = vunpack.c.l.b16 %v302
    %v435 = vunpack.c.l.b16 %v303
    %v436 = vunpack.c.l.b16 %v304
    %v437 = vunpack.c.l.b16 %v305
    %v438 = vunpack.c.l.b16 %v306
    %v439 = vunpack.c.l.b16 %v307
    %v440 = vunpack.c.l.b16 %v308
    %v441 = vunpack.c.l.b16 %v309
    %v442 = vunpack.c.l.b16 %v310
    %v443 = vunpack.c.l.b16 %v311
    %v444 = vunpack.c.l.b16 %v312
    %v445 = vunpack.c.l.b16 %v313
    %v446 = vunpack.c.l.b16 %v314
    %v447 = vunpack.c.l.b16 %v315
    %v448 = vunpack.c.l.b16 %v316
    %v449 = vunpack.c.l.b16 %v317
    %v450 = vunpack.c.l.b16 %v318
    %v451 = vunpack.c.l.b16 %v319
    %v452 = vunpack.c.l.b16 %v320
    %v453 = vunpack.c.l.b16 %v321
    %v454 = vunpack.c.l.b16 %v322
    %v455 = vunpack.c.l.b16 %v323
    %v456 = vunpack.c.l.b16 %v324
    %v457 = vpack.c.b16 %v394, %v393
    %v458 = vpack.c.b16 %v396, %v395
    %v459 = vpack.c.b16 %v398, %v397
    %v460 = vpack.c.b16 %v400, %v399
    %v461 = vpack.c.b16 %v402, %v401
    %v462 = vpack.c.b16 %v404, %v403
    %v463 = vpack.c.b16 %v406, %v405
    %v464 = vpack.c.b16 %v408, %v407
    %v465 = vpack.c.b16 %v410, %v409
    %v466 = vpack.c.b16 %v412, %v411
    %v467 = vpack.c.b16 %v414, %v413
    %v468 = vpack.c.b16 %v416, %v415
    %v469 = vpack.c.b16 %v418, %v417
    %v470 = vpack.c.b16 %v420, %v419
    %v471 = vpack.c.b16 %v422, %v421
    %v472 = vpack.c.b16 %v424, %v423
    %v473 = vpack.c.b16 %v426, %v425
    %v474 = vpack.c.b16 %v428, %v427
    %v475 = vpack.c.b16 %v430, %v429
    %v476 = vpack.c.b16 %v432, %v431
    %v477 = vpack.c.b16 %v434, %v433
    %v478 = vpack.c.b16 %v436, %v435
    %v479 = vpack.c.b16 %v438, %v437
    %v480 = vpack.c.b16 %v440, %v439
    %v481 = vpack.c.b16 %v442, %v441
    %v482 = vpack.c.b16 %v444, %v443
    %v483 = vpack.c.b16 %v446, %v445
    %v484 = vpack.c.b16 %v448, %v447
    %v485 = vpack.c.b16 %v450, %v449
    %v486 = vpack.c.b16 %v452, %v451
    %v487 = vpack.c.b16 %v454, %v453
    %v488 = vpack.c.b16 %v456, %v455
    %521 = vmatpush.bf16.msra.mxu0 %v464
    %522 = vmatpush.bf16.msra.mxu0 %v463
    %523 = vmatpush.bf16.msra.mxu0 %v462
    %524 = vmatpush.bf16.msra.mxu0 %v461
    %525 = vmatpush.bf16.msra.mxu0 %v460
    %526 = vmatpush.bf16.msra.mxu0 %v459
    %527 = vmatpush.bf16.msra.mxu0 %v458
    %528 = vmatpush.bf16.msra.mxu0 %v457
    %529 = vmatmul.bf16.gmra.mxu0 %v257
    %v530 = vpop.f32.mrf.mxu0
    %v531 = vadd.f32 %v327, %v530
    %v532 = vpop.f32.mrf.mxu0
    %533 = vdwg.mxu0
    %534 = vmatpush.bf16.msra.mxu0 %v472
    %535 = vmatpush.bf16.msra.mxu0 %v471
    %536 = vmatpush.bf16.msra.mxu0 %v470
    %537 = vmatpush.bf16.msra.mxu0 %v469
    %538 = vmatpush.bf16.msra.mxu0 %v468
    %539 = vmatpush.bf16.msra.mxu0 %v467
    %540 = vmatpush.bf16.msra.mxu0 %v466
    %541 = vmatpush.bf16.msra.mxu0 %v465
    %542 = vmatmul.bf16.gmra.mxu0 %v258
    %v543 = vpop.f32.mrf.mxu0
    %v544 = vadd.f32 %v531, %v543
    %v545 = vpop.f32.mrf.mxu0
    %546 = vdwg.mxu0
    %547 = vmatpush.bf16.msra.mxu0 %v480
    %548 = vmatpush.bf16.msra.mxu0 %v479
    %549 = vmatpush.bf16.msra.mxu0 %v478
    %550 = vmatpush.bf16.msra.mxu0 %v477
    %551 = vmatpush.bf16.msra.mxu0 %v476
    %552 = vmatpush.bf16.msra.mxu0 %v475
    %553 = vmatpush.bf16.msra.mxu0 %v474
    %554 = vmatpush.bf16.msra.mxu0 %v473
    %555 = vmatmul.bf16.gmra.mxu0 %v259
    %v556 = vpop.f32.mrf.mxu0
    %v557 = vadd.f32 %v544, %v556
    %v558 = vpop.f32.mrf.mxu0
    %559 = vdwg.mxu0
    %560 = vmatpush.bf16.msra.mxu0 %v488
    %561 = vmatpush.bf16.msra.mxu0 %v487
    %562 = vmatpush.bf16.msra.mxu0 %v486
    %563 = vmatpush.bf16.msra.mxu0 %v485
    %564 = vmatpush.bf16.msra.mxu0 %v484
    %565 = vmatpush.bf16.msra.mxu0 %v483
    %566 = vmatpush.bf16.msra.mxu0 %v482
    %567 = vmatpush.bf16.msra.mxu0 %v481
    %568 = vmatmul.bf16.gmra.mxu0 %v260
    %v569 = vpop.f32.mrf.mxu0
    %v570 = vadd.f32 %v557, %v569
    %v571 = vpop.f32.mrf.mxu0
    %572 = vdwg.mxu0
    %v573 = vmax.f32 %v570, 0.0
    %v574 = vld [vmem:[%s5] sm:$0x1]
    %v576 = vperm.slane %v574, 0
    %v578 = vmul.f32 %v573, %v576
    %579 = vadd.xlane.f32.xlu0 %v578
    %v580 = vpop.xlane.xlu0 %579
    %v581 = vld [vmem:[#allocation2] sm:$0x1]
    %v583 = vperm.slane %v581, 0
    %v585 = vadd.f32 %v580, %v583
    %v586 = vmax.f32 %v585, 0.0
    %vm587 = vcmask 7168
    %588 = vst.msk [vmem:[%s7] sm:$0xff] %vm587, %v586
    // Predicated region
    $region46: #{tpu_custom_call.1} parent=1 // pred_check
      _
    $region47: #{tpu_custom_call.1} parent=1 // pred_check_branch
      %590 = sbr.rel (0) target = $region49
    $region48: #{tpu_custom_call.1} parent=1 // pred_region
      _
    $region49: #{tpu_custom_call.1} parent=1 // pred_fallthru
      _
    // Predicated region
    $region50: #{tpu_custom_call.1} parent=1 // pred_check
      _
    $region51: #{tpu_custom_call.1} parent=1 // pred_check_branch
      %592 = sbr.rel (0) target = $region53
    $region52: #{tpu_custom_call.1} parent=1 // pred_region
      _
    $region53: #{tpu_custom_call.1} parent=1 // pred_fallthru
      _
    %593 = vsyncpa [#allocation4], 1
    %594 = vsyncpa [#allocation6], 1
    %595 = vsyncpa [#allocation9], 1

</llo_original>
